<compile_context>
chip_gen: v6e
topology: v6e:2x2x1
jax: 0.10.0
libtpu: 0.0.40
codegen_flags: <defaults>
</compile_context>

<pallas_src>
import functools

import numpy as np
import jax
import jax.numpy as jnp
from jax.experimental import pallas as pl
from jax.experimental.pallas import tpu as pltpu


# ----------------------------- mesh / fea setup (deterministic) ---------------

def lk(E=1.0, nu=0.3):
    """Standard 2D plane-stress Q4 element stiffness matrix (8x8, symmetric)."""
    k = np.array([1 / 2 - nu / 6, 1 / 8 + nu / 8, -1 / 4 - nu / 12,
                  -1 / 8 + 3 * nu / 8, -1 / 4 + nu / 12, -1 / 8 - nu / 8,
                  nu / 6, 1 / 8 - 3 * nu / 8])
    KE = E / (1 - nu ** 2) * np.array([
        [k[0], k[1], k[2], k[3], k[4], k[5], k[6], k[7]],
        [k[1], k[0], k[7], k[6], k[5], k[4], k[3], k[2]],
        [k[2], k[7], k[0], k[5], k[6], k[3], k[4], k[1]],
        [k[3], k[6], k[5], k[0], k[7], k[2], k[1], k[4]],
        [k[4], k[5], k[6], k[7], k[0], k[1], k[2], k[3]],
        [k[5], k[4], k[3], k[2], k[1], k[0], k[7], k[6]],
        [k[6], k[3], k[4], k[1], k[2], k[7], k[0], k[5]],
        [k[7], k[2], k[1], k[4], k[3], k[6], k[5], k[0]]])
    return KE


def build_edofmat_colmajor(nelx, nely):
    """PyTorch-reference connectivity: flat element index e = ely + elx*nely."""
    edofMat = np.zeros((nelx * nely, 8), dtype=np.int32)
    for elx in range(nelx):
        for ely in range(nely):
            el = ely + elx * nely
            n1 = (nely + 1) * elx + ely
            n2 = (nely + 1) * (elx + 1) + ely
            edofMat[el, :] = np.array(
                [2 * n1 + 2, 2 * n1 + 3, 2 * n2 + 2, 2 * n2 + 3,
                 2 * n2, 2 * n2 + 1, 2 * n1, 2 * n1 + 1], dtype=np.int32)
    return edofMat


# ----------------------------- Pallas kernel ----------------------------------

def _compliance_kernel(ue_ref, rho_ref, vol_ref, solid_ref,
                       loss_ref, comp_ref, vv_ref, acc_ref,
                       *, ke, penal, lambda_vol, emin, emax, inv_n_ele):
    """Per-(batch, element-tile) compliance / volume accumulation.

    Block views:
      ue_ref   : (1, 8, TILE)  element DOFs on sublanes, elements on lanes
      rho_ref  : (1, 1, TILE)  densities (column-major element order, 0-padded)
      vol_ref  : (1, 1, TILE)  volume field (same layout)
      solid_ref: (B,) SMEM     solid compliance per batch
      outputs  : (1, 1, 128)   lane-dense scalar-broadcast blocks per batch
      acc_ref  : (2,) SMEM     [compliance_acc, sum(rho - vol)_acc]
    Static args: ke (8x8 numpy, baked as scalar immediates), penal (Python int),
    lambda_vol, emin, emax, inv_n_ele.
    """
    b = pl.program_id(0)
    t = pl.program_id(1)
    n_tiles = pl.num_programs(1)

    @pl.when(t == 0)
    def _init():
        acc_ref[0] = jnp.float32(0.0)
        acc_ref[1] = jnp.float32(0.0)

    ue = ue_ref[0]                                   # (8, TILE), lane-dense
    rows = [ue[i:i + 1, :] for i in range(8)]        # (1, TILE) DOF rows

    # ce_e = u_e^T KE u_e, factored with KE symmetry:
    #   ce = sum_i u_i * ( KE_ii*u_i + sum_{j>i} (KE_ij + KE_ji)*u_j )
    # KE entries are compile-time scalar immediates -> pure VPU work,
    # no MXU, no cross-lane reduction on the hot path.
    ce = None
    for i in range(8):
        inner = float(ke[i, i]) * rows[i]
        for j in range(i + 1, 8):
            inner = inner + float(ke[i, j] + ke[j, i]) * rows[j]
        contrib = rows[i] * inner                    # (1, TILE)
        ce = contrib if ce is None else ce + contrib

    rho = rho_ref[0]                                 # (1, TILE)
    vol = vol_ref[0]                                 # (1, TILE)
    # SIMP interpolation; penal is a Python int -> integer_pow (VPU, not EUP).
    simp = emin + (rho ** penal) * (emax - emin)

    acc_ref[0] = acc_ref[0] + jnp.sum(simp * ce)     # padded lanes have ce == 0
    acc_ref[1] = acc_ref[1] + jnp.sum(rho - vol)     # padded lanes are 0

    @pl.when(t == n_tiles - 1)
    def _finalize():
        compliance = acc_ref[0]
        volume_violation = jnp.abs(acc_ref[1]) * inv_n_ele
        loss = compliance / solid_ref[b] + lambda_vol * volume_violation
        # TODO(synk): the PyTorch "negative compliance" RuntimeError cannot be
        # raised inside a TPU kernel; it is checked host-side in __main__.
        comp_ref[...] = jnp.full((1, 1, 128), compliance, jnp.float32)
        vv_ref[...] = jnp.full((1, 1, 128), volume_violation, jnp.float32)
        loss_ref[...] = jnp.full((1, 1, 128), loss, jnp.float32)


# ----------------------------- wrapper -----------------------------------------

def _build_ue_colmajor(U, nelx, nely):
    """Gather-free element DOF extraction.

    Returns Ue of shape (B, 8, nele) where the flat element index is
    e = elx*nely + ely (column-major, matching the PyTorch edofMat order),
    built purely from static strided slices of the nodal displacement grid.
    """
    B = U.shape[0]
    U4 = U.reshape(B, nelx + 1, nely + 1, 2)
    nele = nelx * nely
    slabs = [
        U4[:, :nelx, 1:, 0],      # 2*n1 + 2
        U4[:, :nelx, 1:, 1],      # 2*n1 + 3
        U4[:, 1:, 1:, 0],         # 2*n2 + 2
        U4[:, 1:, 1:, 1],         # 2*n2 + 3
        U4[:, 1:, :nely, 0],      # 2*n2
        U4[:, 1:, :nely, 1],      # 2*n2 + 1
        U4[:, :nelx, :nely, 0],   # 2*n1
        U4[:, :nelx, :nely, 1],   # 2*n1 + 1
    ]
    return jnp.stack([s.reshape(B, nele) for s in slabs], axis=1)   # (B, 8, nele)


def compliance_loss_pallas(rho, U, vol_field, solid_comp, KE_np,
                           penal=3, lambda_vol=10.0, Emin=1e-9, Emax=1.0,
                           tile=4096):
    """Pallas implementation of ComplianceLoss.forward.

    Args:
      rho:        (B, nely, nelx) f32 densities
      U:          (B, ndof)       f32 nodal displacements, ndof=2(nelx+1)(nely+1)
      vol_field:  (B, nely, nelx) f32 volume field
      solid_comp: (B,)            f32 solid-design compliance
      KE_np:      (8, 8) numpy element stiffness matrix (baked into the kernel)
    Returns:
      (loss, compliance, volume_violation), each (B,) f32.
    """
    B, nely, nelx = rho.shape
    nele = nely * nelx
    lane = 128

    # Balanced element tiling: TILE multiple of 128, waste < 128 lanes total.
    nele_lanes = -(-nele // lane)
    req_lanes = max(int(tile) // lane, 1)
    n_tiles = max(1, -(-nele_lanes // req_lanes))
    TILE = (-(-nele_lanes // n_tiles)) * lane
    nele_pad = TILE * n_tiles
    pad_e = nele_pad - nele

    # --- plain-JAX glue: slice-based Ue (no gather), column-major element order.
    Ue = _build_ue_colmajor(U.astype(jnp.float32), nelx, nely)        # (B, 8, nele)
    Ue = jnp.pad(Ue, ((0, 0), (0, 0), (0, pad_e)))                    # zero pad

    rho_cm = jnp.transpose(rho.astype(jnp.float32), (0, 2, 1)).reshape(B, 1, nele)
    vol_cm = jnp.transpose(vol_field.astype(jnp.float32), (0, 2, 1)).reshape(B, 1, nele)
    rho_cm = jnp.pad(rho_cm, ((0, 0), (0, 0), (0, pad_e)))
    vol_cm = jnp.pad(vol_cm, ((0, 0), (0, 0), (0, pad_e)))

    kernel = functools.partial(
        _compliance_kernel,
        ke=np.asarray(KE_np, dtype=np.float64),
        penal=int(penal), lambda_vol=float(lambda_vol),
        emin=float(Emin), emax=float(Emax), inv_n_ele=float(1.0 / nele))

    out_shape = [jax.ShapeDtypeStruct((B, 1, 128), jnp.float32)] * 3

    loss, compliance, volume_violation = pl.pallas_call(
        kernel,
        out_shape=out_shape,
        grid=(B, n_tiles),
        in_specs=[
            pl.BlockSpec((1, 8, TILE), lambda b, t: (b, 0, t)),   # Ue (lane-dense)
            pl.BlockSpec((1, 1, TILE), lambda b, t: (b, 0, t)),   # rho
            pl.BlockSpec((1, 1, TILE), lambda b, t: (b, 0, t)),   # vol
            pl.BlockSpec(memory_space=pltpu.SMEM),                # solid_comp (B,)
        ],
        out_specs=[pl.BlockSpec((1, 1, 128), lambda b, t: (b, 0, 0))] * 3,
        scratch_shapes=[pltpu.SMEM((2,), jnp.float32)],
        compiler_params=pltpu.CompilerParams(
            dimension_semantics=("parallel", "arbitrary")),
    )(Ue, rho_cm, vol_cm, solid_comp.astype(jnp.float32))

    return loss[:, 0, 0], compliance[:, 0, 0], volume_violation[:, 0, 0]


# ----------------------------- pure-JAX reference ------------------------------

def compliance_loss_ref(rho, U, vol_field, solid_comp, KE, edofMat_cm,
                        penal, lambda_vol, Emin, Emax, nelx, nely):
    """Mirrors the PyTorch module (column-major edofMat + reshape/transpose)."""
    B = rho.shape[0]
    Ue = jnp.take(U, jnp.asarray(edofMat_cm), axis=1)                    # (B,nele,8)
    ce = jnp.sum(jnp.einsum('bek,kj->bej', Ue, KE) * Ue, axis=-1)        # (B,nele)
    ce = jnp.transpose(ce.reshape(B, nelx, nely), (0, 2, 1))             # (B,nely,nelx)
    compliance = jnp.sum((Emin + rho ** penal * (Emax - Emin)) * ce, axis=(1, 2))
    n_ele = float(nelx * nely)
    vv = jnp.abs(jnp.sum(rho, axis=(1, 2)) / n_ele
                 - jnp.sum(vol_field, axis=(1, 2)) / n_ele)
    loss = compliance / solid_comp + lambda_vol * vv
    return loss, compliance, vv


# ----------------------------- main --------------------------------------------

if __name__ == "__main__":
    def run_case(B, nelx, nely, tile):
        ndof = 2 * (nelx + 1) * (nely + 1)
        penal, lambda_vol = 3, 10.0
        Emin, Emax = 1e-9, 1.0

        KE_np = lk()
        edof_cm = build_edofmat_colmajor(nelx, nely)

        key = jax.random.PRNGKey(0)
        k1, k2, k3, k4 = jax.random.split(key, 4)
        rho = jax.random.uniform(k1, (B, nely, nelx), jnp.float32, 0.05, 0.95)
        U = 0.1 * jax.random.normal(k2, (B, ndof), jnp.float32)
        vol_field = jax.random.uniform(k3, (B, nely, nelx), jnp.float32, 0.0, 1.0)
        solid_comp = jax.random.uniform(k4, (B,), jnp.float32, 5.0, 15.0)

        loss, compliance, vv = compliance_loss_pallas(
            rho, U, vol_field, solid_comp, KE_np,
            penal=penal, lambda_vol=lambda_vol, Emin=Emin, Emax=Emax, tile=tile)
        jax.block_until_ready((loss, compliance, vv))

        # host-side mirror of the PyTorch RuntimeError on negative compliance
        if bool(jnp.any(compliance < 0)):
            raise RuntimeError("Warning! Negative compliance")

        KE = jnp.asarray(KE_np, dtype=jnp.float32)
        loss_r, comp_r, vv_r = compliance_loss_ref(
            rho, U, vol_field, solid_comp, KE, edof_cm,
            penal, lambda_vol, Emin, Emax, nelx, nely)
        np.testing.assert_allclose(np.asarray(compliance), np.asarray(comp_r),
                                   rtol=1e-4, atol=1e-5)
        np.testing.assert_allclose(np.asarray(vv), np.asarray(vv_r),
                                   rtol=1e-4, atol=3e-5)
        np.testing.assert_allclose(np.asarray(loss), np.asarray(loss_r),
                                   rtol=1e-4, atol=3e-4)

    # small case: single element tile, no padding
    run_case(B=2, nelx=16, nely=8, tile=4096)
    # multi-tile + lane-padding path (exercises accumulator init/finalize)
    run_case(B=3, nelx=20, nely=7, tile=128)
    # moderate mesh: balanced multi-tile split (TILE < requested, zero padding)
    run_case(B=2, nelx=64, nely=48, tile=2048)

    print("KERNEL_OK")
</pallas_src>

<mosaic_0001>
module attributes {stable_mosaic.version = 11 : i64} {
  func.func @_compliance_kernel(%arg0: i32, %arg1: i32, %arg2: memref<1x8x128xf32, #tpu.memory_space<vmem>>, %arg3: memref<1x1x128xf32, #tpu.memory_space<vmem>>, %arg4: memref<1x1x128xf32, #tpu.memory_space<vmem>>, %arg5: memref<2xf32, #tpu.memory_space<smem>>, %arg6: memref<1x1x128xf32, #tpu.memory_space<vmem>>, %arg7: memref<1x1x128xf32, #tpu.memory_space<vmem>>, %arg8: memref<1x1x128xf32, #tpu.memory_space<vmem>>, %arg9: memref<2xf32, #tpu.memory_space<smem>>) attributes {dimension_semantics = [#tpu.dimension_semantics<parallel>, #tpu.dimension_semantics<arbitrary>], iteration_bounds = array<i64: 2, 1>, scalar_prefetch = 0 : i64, scratch_operands = 1 : i64, tpu.core_type = #tpu.core_type<tc>, window_params = [{transform_indices = @transform_0, window_bounds = array<i64: 1, 8, 128>}, {transform_indices = @transform_1, window_bounds = array<i64: 1, 1, 128>}, {transform_indices = @transform_2, window_bounds = array<i64: 1, 1, 128>}, {transform_indices = @transform_3, window_bounds = array<i64: 2>}, {transform_indices = @transform_4, window_bounds = array<i64: 1, 1, 128>}, {transform_indices = @transform_5, window_bounds = array<i64: 1, 1, 128>}, {transform_indices = @transform_6, window_bounds = array<i64: 1, 1, 128>}]} {
    %c0_i32 = arith.constant 0 : i32
    %0 = arith.cmpi eq, %arg1, %c0_i32 : i32
    %1 = arith.extui %0 : i1 to i32
    %c0_i32_0 = arith.constant 0 : i32
    %2 = arith.cmpi ne, %1, %c0_i32_0 : i32
    scf.if %2 {
      %cst_53 = arith.constant 0.000000e+00 : f32
      %c0_54 = arith.constant 0 : index
      %157 = memref.load %arg9[%c0_54] : memref<2xf32, #tpu.memory_space<smem>>
      memref.store %cst_53, %arg9[%c0_54] : memref<2xf32, #tpu.memory_space<smem>>
      %cst_55 = arith.constant 0.000000e+00 : f32
      %c1_56 = arith.constant 1 : index
      %158 = memref.load %arg9[%c1_56] : memref<2xf32, #tpu.memory_space<smem>>
      memref.store %cst_55, %arg9[%c1_56] : memref<2xf32, #tpu.memory_space<smem>>
    } else {
    }
    %c0 = arith.constant 0 : index
    %c0_1 = arith.constant 0 : index
    %c0_2 = arith.constant 0 : index
    %3 = vector.load %arg2[%c0, %c0_1, %c0_2] : memref<1x8x128xf32, #tpu.memory_space<vmem>>, vector<1x8x128xf32>
    %4 = vector.shape_cast %3 : vector<1x8x128xf32> to vector<8x128xf32>
    %5 = vector.extract_strided_slice %4 {offsets = [0, 0], sizes = [1, 128], strides = [1, 1]} : vector<8x128xf32> to vector<1x128xf32>
    %6 = vector.extract_strided_slice %4 {offsets = [1, 0], sizes = [1, 128], strides = [1, 1]} : vector<8x128xf32> to vector<1x128xf32>
    %7 = vector.extract_strided_slice %4 {offsets = [2, 0], sizes = [1, 128], strides = [1, 1]} : vector<8x128xf32> to vector<1x128xf32>
    %8 = vector.extract_strided_slice %4 {offsets = [3, 0], sizes = [1, 128], strides = [1, 1]} : vector<8x128xf32> to vector<1x128xf32>
    %9 = vector.extract_strided_slice %4 {offsets = [4, 0], sizes = [1, 128], strides = [1, 1]} : vector<8x128xf32> to vector<1x128xf32>
    %10 = vector.extract_strided_slice %4 {offsets = [5, 0], sizes = [1, 128], strides = [1, 1]} : vector<8x128xf32> to vector<1x128xf32>
    %11 = vector.extract_strided_slice %4 {offsets = [6, 0], sizes = [1, 128], strides = [1, 1]} : vector<8x128xf32> to vector<1x128xf32>
    %12 = vector.extract_strided_slice %4 {offsets = [7, 0], sizes = [1, 128], strides = [1, 1]} : vector<8x128xf32> to vector<1x128xf32>
    %cst = arith.constant 0.494505495 : f32
    %13 = vector.broadcast %cst : f32 to vector<1x128xf32>
    %14 = arith.mulf %13, %5 : vector<1x128xf32>
    %cst_3 = arith.constant 0.357142866 : f32
    %15 = vector.broadcast %cst_3 : f32 to vector<1x128xf32>
    %16 = arith.mulf %15, %6 : vector<1x128xf32>
    %17 = arith.addf %14, %16 : vector<1x128xf32>
    %cst_4 = arith.constant -0.604395628 : f32
    %18 = vector.broadcast %cst_4 : f32 to vector<1x128xf32>
    %19 = arith.mulf %18, %7 : vector<1x128xf32>
    %20 = arith.addf %17, %19 : vector<1x128xf32>
    %cst_5 = arith.constant -0.0274725277 : f32
    %21 = vector.broadcast %cst_5 : f32 to vector<1x128xf32>
    %22 = arith.mulf %21, %8 : vector<1x128xf32>
    %23 = arith.addf %20, %22 : vector<1x128xf32>
    %cst_6 = arith.constant -0.494505495 : f32
    %24 = vector.broadcast %cst_6 : f32 to vector<1x128xf32>
    %25 = arith.mulf %24, %9 : vector<1x128xf32>
    %26 = arith.addf %23, %25 : vector<1x128xf32>
    %cst_7 = arith.constant -0.357142866 : f32
    %27 = vector.broadcast %cst_7 : f32 to vector<1x128xf32>
    %28 = arith.mulf %27, %10 : vector<1x128xf32>
    %29 = arith.addf %26, %28 : vector<1x128xf32>
    %cst_8 = arith.constant 0.109890111 : f32
    %30 = vector.broadcast %cst_8 : f32 to vector<1x128xf32>
    %31 = arith.mulf %30, %11 : vector<1x128xf32>
    %32 = arith.addf %29, %31 : vector<1x128xf32>
    %cst_9 = arith.constant 0.0274725277 : f32
    %33 = vector.broadcast %cst_9 : f32 to vector<1x128xf32>
    %34 = arith.mulf %33, %12 : vector<1x128xf32>
    %35 = arith.addf %32, %34 : vector<1x128xf32>
    %36 = arith.mulf %5, %35 : vector<1x128xf32>
    %cst_10 = arith.constant 0.494505495 : f32
    %37 = vector.broadcast %cst_10 : f32 to vector<1x128xf32>
    %38 = arith.mulf %37, %6 : vector<1x128xf32>
    %cst_11 = arith.constant 0.0274725277 : f32
    %39 = vector.broadcast %cst_11 : f32 to vector<1x128xf32>
    %40 = arith.mulf %39, %7 : vector<1x128xf32>
    %41 = arith.addf %38, %40 : vector<1x128xf32>
    %cst_12 = arith.constant 0.109890111 : f32
    %42 = vector.broadcast %cst_12 : f32 to vector<1x128xf32>
    %43 = arith.mulf %42, %8 : vector<1x128xf32>
    %44 = arith.addf %41, %43 : vector<1x128xf32>
    %cst_13 = arith.constant -0.357142866 : f32
    %45 = vector.broadcast %cst_13 : f32 to vector<1x128xf32>
    %46 = arith.mulf %45, %9 : vector<1x128xf32>
    %47 = arith.addf %44, %46 : vector<1x128xf32>
    %cst_14 = arith.constant -0.494505495 : f32
    %48 = vector.broadcast %cst_14 : f32 to vector<1x128xf32>
    %49 = arith.mulf %48, %10 : vector<1x128xf32>
    %50 = arith.addf %47, %49 : vector<1x128xf32>
    %cst_15 = arith.constant -0.0274725277 : f32
    %51 = vector.broadcast %cst_15 : f32 to vector<1x128xf32>
    %52 = arith.mulf %51, %11 : vector<1x128xf32>
    %53 = arith.addf %50, %52 : vector<1x128xf32>
    %cst_16 = arith.constant -0.604395628 : f32
    %54 = vector.broadcast %cst_16 : f32 to vector<1x128xf32>
    %55 = arith.mulf %54, %12 : vector<1x128xf32>
    %56 = arith.addf %53, %55 : vector<1x128xf32>
    %57 = arith.mulf %6, %56 : vector<1x128xf32>
    %58 = arith.addf %36, %57 : vector<1x128xf32>
    %cst_17 = arith.constant 0.494505495 : f32
    %59 = vector.broadcast %cst_17 : f32 to vector<1x128xf32>
    %60 = arith.mulf %59, %7 : vector<1x128xf32>
    %cst_18 = arith.constant -0.357142866 : f32
    %61 = vector.broadcast %cst_18 : f32 to vector<1x128xf32>
    %62 = arith.mulf %61, %8 : vector<1x128xf32>
    %63 = arith.addf %60, %62 : vector<1x128xf32>
    %cst_19 = arith.constant 0.109890111 : f32
    %64 = vector.broadcast %cst_19 : f32 to vector<1x128xf32>
    %65 = arith.mulf %64, %9 : vector<1x128xf32>
    %66 = arith.addf %63, %65 : vector<1x128xf32>
    %cst_20 = arith.constant -0.0274725277 : f32
    %67 = vector.broadcast %cst_20 : f32 to vector<1x128xf32>
    %68 = arith.mulf %67, %10 : vector<1x128xf32>
    %69 = arith.addf %66, %68 : vector<1x128xf32>
    %cst_21 = arith.constant -0.494505495 : f32
    %70 = vector.broadcast %cst_21 : f32 to vector<1x128xf32>
    %71 = arith.mulf %70, %11 : vector<1x128xf32>
    %72 = arith.addf %69, %71 : vector<1x128xf32>
    %cst_22 = arith.constant 0.357142866 : f32
    %73 = vector.broadcast %cst_22 : f32 to vector<1x128xf32>
    %74 = arith.mulf %73, %12 : vector<1x128xf32>
    %75 = arith.addf %72, %74 : vector<1x128xf32>
    %76 = arith.mulf %7, %75 : vector<1x128xf32>
    %77 = arith.addf %58, %76 : vector<1x128xf32>
    %cst_23 = arith.constant 0.494505495 : f32
    %78 = vector.broadcast %cst_23 : f32 to vector<1x128xf32>
    %79 = arith.mulf %78, %8 : vector<1x128xf32>
    %cst_24 = arith.constant 0.0274725277 : f32
    %80 = vector.broadcast %cst_24 : f32 to vector<1x128xf32>
    %81 = arith.mulf %80, %9 : vector<1x128xf32>
    %82 = arith.addf %79, %81 : vector<1x128xf32>
    %cst_25 = arith.constant -0.604395628 : f32
    %83 = vector.broadcast %cst_25 : f32 to vector<1x128xf32>
    %84 = arith.mulf %83, %10 : vector<1x128xf32>
    %85 = arith.addf %82, %84 : vector<1x128xf32>
    %cst_26 = arith.constant 0.357142866 : f32
    %86 = vector.broadcast %cst_26 : f32 to vector<1x128xf32>
    %87 = arith.mulf %86, %11 : vector<1x128xf32>
    %88 = arith.addf %85, %87 : vector<1x128xf32>
    %cst_27 = arith.constant -0.494505495 : f32
    %89 = vector.broadcast %cst_27 : f32 to vector<1x128xf32>
    %90 = arith.mulf %89, %12 : vector<1x128xf32>
    %91 = arith.addf %88, %90 : vector<1x128xf32>
    %92 = arith.mulf %8, %91 : vector<1x128xf32>
    %93 = arith.addf %77, %92 : vector<1x128xf32>
    %cst_28 = arith.constant 0.494505495 : f32
    %94 = vector.broadcast %cst_28 : f32 to vector<1x128xf32>
    %95 = arith.mulf %94, %9 : vector<1x128xf32>
    %cst_29 = arith.constant 0.357142866 : f32
    %96 = vector.broadcast %cst_29 : f32 to vector<1x128xf32>
    %97 = arith.mulf %96, %10 : vector<1x128xf32>
    %98 = arith.addf %95, %97 : vector<1x128xf32>
    %cst_30 = arith.constant -0.604395628 : f32
    %99 = vector.broadcast %cst_30 : f32 to vector<1x128xf32>
    %100 = arith.mulf %99, %11 : vector<1x128xf32>
    %101 = arith.addf %98, %100 : vector<1x128xf32>
    %cst_31 = arith.constant -0.0274725277 : f32
    %102 = vector.broadcast %cst_31 : f32 to vector<1x128xf32>
    %103 = arith.mulf %102, %12 : vector<1x128xf32>
    %104 = arith.addf %101, %103 : vector<1x128xf32>
    %105 = arith.mulf %9, %104 : vector<1x128xf32>
    %106 = arith.addf %93, %105 : vector<1x128xf32>
    %cst_32 = arith.constant 0.494505495 : f32
    %107 = vector.broadcast %cst_32 : f32 to vector<1x128xf32>
    %108 = arith.mulf %107, %10 : vector<1x128xf32>
    %cst_33 = arith.constant 0.0274725277 : f32
    %109 = vector.broadcast %cst_33 : f32 to vector<1x128xf32>
    %110 = arith.mulf %109, %11 : vector<1x128xf32>
    %111 = arith.addf %108, %110 : vector<1x128xf32>
    %cst_34 = arith.constant 0.109890111 : f32
    %112 = vector.broadcast %cst_34 : f32 to vector<1x128xf32>
    %113 = arith.mulf %112, %12 : vector<1x128xf32>
    %114 = arith.addf %111, %113 : vector<1x128xf32>
    %115 = arith.mulf %10, %114 : vector<1x128xf32>
    %116 = arith.addf %106, %115 : vector<1x128xf32>
    %cst_35 = arith.constant 0.494505495 : f32
    %117 = vector.broadcast %cst_35 : f32 to vector<1x128xf32>
    %118 = arith.mulf %117, %11 : vector<1x128xf32>
    %cst_36 = arith.constant -0.357142866 : f32
    %119 = vector.broadcast %cst_36 : f32 to vector<1x128xf32>
    %120 = arith.mulf %119, %12 : vector<1x128xf32>
    %121 = arith.addf %118, %120 : vector<1x128xf32>
    %122 = arith.mulf %11, %121 : vector<1x128xf32>
    %123 = arith.addf %116, %122 : vector<1x128xf32>
    %cst_37 = arith.constant 0.494505495 : f32
    %124 = vector.broadcast %cst_37 : f32 to vector<1x128xf32>
    %125 = arith.mulf %124, %12 : vector<1x128xf32>
    %126 = arith.mulf %12, %125 : vector<1x128xf32>
    %127 = arith.addf %123, %126 : vector<1x128xf32>
    %c0_38 = arith.constant 0 : index
    %c0_39 = arith.constant 0 : index
    %c0_40 = arith.constant 0 : index
    %128 = vector.load %arg3[%c0_38, %c0_39, %c0_40] : memref<1x1x128xf32, #tpu.memory_space<vmem>>, vector<1x1x128xf32>
    %129 = vector.shape_cast %128 : vector<1x1x128xf32> to vector<1x128xf32>
    %c0_41 = arith.constant 0 : index
    %c0_42 = arith.constant 0 : index
    %c0_43 = arith.constant 0 : index
    %130 = vector.load %arg4[%c0_41, %c0_42, %c0_43] : memref<1x1x128xf32, #tpu.memory_space<vmem>>, vector<1x1x128xf32>
    %131 = vector.shape_cast %130 : vector<1x1x128xf32> to vector<1x128xf32>
    %132 = arith.mulf %129, %129 : vector<1x128xf32>
    %133 = arith.mulf %129, %132 : vector<1x128xf32>
    %cst_44 = arith.constant 1.000000e+00 : f32
    %134 = vector.broadcast %cst_44 : f32 to vector<1x128xf32>
    %135 = arith.mulf %133, %134 : vector<1x128xf32>
    %cst_45 = arith.constant 9.99999971E-10 : f32
    %136 = vector.broadcast %cst_45 : f32 to vector<1x128xf32>
    %137 = arith.addf %136, %135 : vector<1x128xf32>
    %c0_46 = arith.constant 0 : index
    %138 = memref.load %arg9[%c0_46] : memref<2xf32, #tpu.memory_space<smem>>
    %139 = arith.mulf %137, %127 : vector<1x128xf32>
    %140 = vector.shape_cast %139 : vector<1x128xf32> to vector<1x1x128xf32>
    %cst_47 = arith.constant dense<0.000000e+00> : vector<1xf32>
    %141 = vector.multi_reduction <add>, %140, %cst_47 [1, 2] : vector<1x1x128xf32> to vector<1xf32>
    %142 = vector.shape_cast %141 : vector<1xf32> to vector<1x1x1xf32>
    %143 = vector.extract %142[0, 0, 0] : f32 from vector<1x1x1xf32>
    %144 = arith.addf %138, %143 : f32
    %c0_48 = arith.constant 0 : index
    %145 = memref.load %arg9[%c0_48] : memref<2xf32, #tpu.memory_space<smem>>
    memref.store %144, %arg9[%c0_48] : memref<2xf32, #tpu.memory_space<smem>>
    %c1 = arith.constant 1 : index
    %146 = memref.load %arg9[%c1] : memref<2xf32, #tpu.memory_space<smem>>
    %147 = arith.subf %129, %131 : vector<1x128xf32>
    %148 = vector.shape_cast %147 : vector<1x128xf32> to vector<1x1x128xf32>
    %cst_49 = arith.constant dense<0.000000e+00> : vector<1xf32>
    %149 = vector.multi_reduction <add>, %148, %cst_49 [1, 2] : vector<1x1x128xf32> to vector<1xf32>
    %150 = vector.shape_cast %149 : vector<1xf32> to vector<1x1x1xf32>
    %151 = vector.extract %150[0, 0, 0] : f32 from vector<1x1x1xf32>
    %152 = arith.addf %146, %151 : f32
    %c1_50 = arith.constant 1 : index
    %153 = memref.load %arg9[%c1_50] : memref<2xf32, #tpu.memory_space<smem>>
    memref.store %152, %arg9[%c1_50] : memref<2xf32, #tpu.memory_space<smem>>
    %c0_i32_51 = arith.constant 0 : i32
    %154 = arith.cmpi eq, %arg1, %c0_i32_51 : i32
    %155 = arith.extui %154 : i1 to i32
    %c0_i32_52 = arith.constant 0 : i32
    %156 = arith.cmpi ne, %155, %c0_i32_52 : i32
    scf.if %156 {
      %c0_53 = arith.constant 0 : index
      %157 = memref.load %arg9[%c0_53] : memref<2xf32, #tpu.memory_space<smem>>
      %c1_54 = arith.constant 1 : index
      %158 = memref.load %arg9[%c1_54] : memref<2xf32, #tpu.memory_space<smem>>
      %159 = math.absf %158 : f32
      %cst_55 = arith.constant 7.812500e-03 : f32
      %160 = arith.mulf %159, %cst_55 : f32
      %161 = arith.index_cast %arg0 : i32 to index
      %162 = memref.load %arg5[%161] : memref<2xf32, #tpu.memory_space<smem>>
      %163 = arith.divf %157, %162 : f32
      %cst_56 = arith.constant 1.000000e+01 : f32
      %164 = arith.mulf %cst_56, %160 : f32
      %165 = arith.addf %163, %164 : f32
      %166 = vector.broadcast %157 : f32 to vector<1x1x128xf32>
      %c0_57 = arith.constant 0 : index
      %c0_58 = arith.constant 0 : index
      %c0_59 = arith.constant 0 : index
      %167 = vector.load %arg7[%c0_57, %c0_58, %c0_59] : memref<1x1x128xf32, #tpu.memory_space<vmem>>, vector<1x1x128xf32>
      tpu.vector_store %arg7[%c0_57, %c0_58, %c0_59], %166 {strides = array<i32>} : memref<1x1x128xf32, #tpu.memory_space<vmem>>, vector<1x1x128xf32>,
      %168 = vector.broadcast %160 : f32 to vector<1x1x128xf32>
      %c0_60 = arith.constant 0 : index
      %c0_61 = arith.constant 0 : index
      %c0_62 = arith.constant 0 : index
      %169 = vector.load %arg8[%c0_60, %c0_61, %c0_62] : memref<1x1x128xf32, #tpu.memory_space<vmem>>, vector<1x1x128xf32>
      tpu.vector_store %arg8[%c0_60, %c0_61, %c0_62], %168 {strides = array<i32>} : memref<1x1x128xf32, #tpu.memory_space<vmem>>, vector<1x1x128xf32>,
      %170 = vector.broadcast %165 : f32 to vector<1x1x128xf32>
      %c0_63 = arith.constant 0 : index
      %c0_64 = arith.constant 0 : index
      %c0_65 = arith.constant 0 : index
      %171 = vector.load %arg6[%c0_63, %c0_64, %c0_65] : memref<1x1x128xf32, #tpu.memory_space<vmem>>, vector<1x1x128xf32>
      tpu.vector_store %arg6[%c0_63, %c0_64, %c0_65], %170 {strides = array<i32>} : memref<1x1x128xf32, #tpu.memory_space<vmem>>, vector<1x1x128xf32>,
    } else {
    }
    return
  }
  func.func @transform_0(%arg0: i32, %arg1: i32) -> (i32, i32, i32) {
    %c0_i32 = arith.constant 0 : i32
    %c0_i32_0 = arith.constant 0 : i32
    return %arg0, %c0_i32, %arg1 : i32, i32, i32
  }
  func.func @transform_1(%arg0: i32, %arg1: i32) -> (i32, i32, i32) {
    %c0_i32 = arith.constant 0 : i32
    %c0_i32_0 = arith.constant 0 : i32
    return %arg0, %c0_i32, %arg1 : i32, i32, i32
  }
  func.func @transform_2(%arg0: i32, %arg1: i32) -> (i32, i32, i32) {
    %c0_i32 = arith.constant 0 : i32
    %c0_i32_0 = arith.constant 0 : i32
    return %arg0, %c0_i32, %arg1 : i32, i32, i32
  }
  func.func @transform_3(%arg0: i32, %arg1: i32) -> i32 {
    %c0_i32 = arith.constant 0 : i32
    %c0_i32_0 = arith.constant 0 : i32
    return %c0_i32 : i32
  }
  func.func @transform_4(%arg0: i32, %arg1: i32) -> (i32, i32, i32) {
    %c0_i32 = arith.constant 0 : i32
    %c0_i32_0 = arith.constant 0 : i32
    %c0_i32_1 = arith.constant 0 : i32
    return %arg0, %c0_i32, %c0_i32_0 : i32, i32, i32
  }
  func.func @transform_5(%arg0: i32, %arg1: i32) -> (i32, i32, i32) {
    %c0_i32 = arith.constant 0 : i32
    %c0_i32_0 = arith.constant 0 : i32
    %c0_i32_1 = arith.constant 0 : i32
    return %arg0, %c0_i32, %c0_i32_0 : i32, i32, i32
  }
  func.func @transform_6(%arg0: i32, %arg1: i32) -> (i32, i32, i32) {
    %c0_i32 = arith.constant 0 : i32
    %c0_i32_0 = arith.constant 0 : i32
    %c0_i32_1 = arith.constant 0 : i32
    return %arg0, %c0_i32, %c0_i32_0 : i32, i32, i32
  }
}

</mosaic_0001>

<llo_original>
// kernel: tpu_custom_call.1
$region0: #{tpu_custom_call.1}
  #allocation0 [shape = 'u32[]', space=smem, size = 0x4, offset = 0x4, fixed_abs, tag = 'smem constant byte address 0x4 - core index']
  #allocation1 [shape = 'u32[144,128]{1,0:T(1,128)}', space=vmem, size = 0x12000, scoped, tag = 'internal scratch']
  #allocation2 [shape = 'f32[2]{0:T(128)}', space=smem, size = 0x200, scoped, tag = 'scratch operand']
  %s0 = inlined_call_operand.hbm [shape: f32[2,8,128], index: 0, kind: input, shape index: {}]
  %s1 = inlined_call_operand.hbm [shape: f32[2,1,128], index: 1, kind: input, shape index: {}]
  %s2 = inlined_call_operand.vmem [shape: f32[2,1,128], index: 2, kind: input, shape index: {}]
  %s3 = inlined_call_operand.vmem [shape: f32[2], index: 3, kind: input, shape index: {}]
  %s4 = inlined_call_operand.hbm [shape: f32[2,1,128], index: 4, kind: output, shape index: {0}]
  %s5 = inlined_call_operand.hbm [shape: f32[2,1,128], index: 5, kind: output, shape index: {1}]
  %s6 = inlined_call_operand.hbm [shape: f32[2,1,128], index: 6, kind: output, shape index: {2}]
  %7 = xla_tuple %s4, %s5, %s6
  %s8 = sld [smem:[#allocation0]]
  $region85: #{tpu_custom_call.1} parent=0
    _
  %s10 = ssub.s32 1, %s8
  %s11 = scalar_select 0, %s10, %s8
  $region1: #{tpu_custom_call.1} parent=0
    #allocation3 [shape = 'u8[8192]{0}', space=vmem, size = 0x2000, scoped, tag = 'input window, operand 0']
    #allocation4 [shape = 's32[2]{0}', space=sflag, size = 0x8, scoped, tag = 'scoped memory for tpu_custom_call.1']
    #allocation5 [shape = 's32[2]{0}', space=sflag, size = 0x8, scoped, tag = 'scoped memory for tpu_custom_call.1']
    #allocation6 [shape = 's32[2]{0}', space=sflag, size = 0x8, scoped, tag = 'scoped memory for tpu_custom_call.1']
    #allocation7 [shape = 'u8[1024]{0}', space=vmem, size = 0x400, scoped, tag = 'input window, operand 1']
    #allocation8 [shape = 's32[2]{0}', space=sflag, size = 0x8, scoped, tag = 'scoped memory for tpu_custom_call.1']
    #allocation9 [shape = 'u8[512]{0}', space=smem, size = 0x200, scoped, tag = 'input window, operand 3, single buffered']
    #allocation10 [shape = 'u8[1024]{0}', space=vmem, size = 0x400, scoped, tag = 'output window, operand 0']
    #allocation11 [shape = 'u8[1024]{0}', space=vmem, size = 0x400, scoped, tag = 'output window, operand 1']
    #allocation12 [shape = 's32[2]{0}', space=sflag, size = 0x8, scoped, tag = 'scoped memory for tpu_custom_call.1']
    #allocation13 [shape = 'u8[1024]{0}', space=vmem, size = 0x400, scoped, tag = 'output window, operand 2']
    %12 = vsyncpa [#allocation4], 0
    %s13 = scalar_lea.sflag [#allocation4], 1
    %14 = vsyncpa %s13, 0
    %15 = vsyncpa [#allocation8], 0
    %s16 = scalar_lea.sflag [#allocation8], 1
    %17 = vsyncpa %s16, 0
    %18 = vsyncpa [#allocation6], 0
    %19 = vsyncpa [#allocation5], 0
    %s20 = scalar_lea.sflag [#allocation5], 1
    %21 = vsyncpa %s20, 0
    %22 = vsyncpa [#allocation12], 0
    %s23 = scalar_lea.sflag [#allocation12], 1
    %24 = vsyncpa %s23, 0
    loop: start=0, step=1, limit=4
    $region2: #{tpu_custom_call.1} parent=1 // loop_pre_header
      _
    $region3: #{tpu_custom_call.1} parent=1 // loop_header
      %s26 = sphi 0, %s30
      %p27 = scmp.ge.s32.totalorder %s26, 4
      %s33 = sphi 0, %s45
      %s34 = sphi 0, %s41
      %s35 = sphi 0, %s33
      %s36 = sphi 0, %s34
      %s37 = sphi 0, %s35
      %s38 = sphi 0, %s36
      %s50 = sphi 0, %s52
      %s53 = sphi 0, %s50
      %s54 = sphi 0, %s53
      %s70 = sphi 0, %s54
      %s78 = sphi 0, %s80
      %s81 = sphi 0, %s78
      %s82 = sphi 0, %s81
      %s98 = sphi 0, %s82
      %s106 = sphi 0, %s108
      %s109 = sphi 0, %s106
      %s110 = sphi 0, %s109
      %s126 = sphi 0, %s110
      %s130 = sphi 0, %s130
      %s132 = sphi 0, %s130
      %s133 = sphi 0, %s132
      %s147 = sphi 0, %s133
      %s153 = sphi 0, %s155
      %s156 = sphi 0, %s153
      %s157 = sphi 0, %s156
      %s173 = sphi 0, %s157
      %s179 = sphi 0, %s181
      %s182 = sphi 0, %s179
      %s183 = sphi 0, %s182
      %s199 = sphi 0, %s183
      %s205 = sphi 0, %s207
      %s208 = sphi 0, %s205
      %s209 = sphi 0, %s208
      %s225 = sphi 0, %s209
    $region4: #{tpu_custom_call.1} parent=1 // loop_header_branch
      %29 = sbr.rel (%p27) target = $region8
    $region5: #{tpu_custom_call.1} parent=1 // loop_body
      %s31 = ssub.s32 %s26, 1
      %s32 = ssub.s32 %s26, 2
      %s39 = sadd.s32 1, %s34
      %p40 = scmp.ge.s32.totalorder %s39, 1
      %s41 = scalar_select %p40, 0, %s39
      %s42 = sadd.s32 1, %s33
      %s43 = scalar_select %p40, %s42, %s33
      %p44 = scmp.ge.s32.totalorder %s43, 2
      %s45 = scalar_select %p44, 0, %s43
      %s46 = ssub.s32 %s33, %s45
      %s47 = ssub.s32 %s34, %s41
      %s48 = sor.u32 %s46, %s47
      %p49 = scmp.eq.s32.totalorder %s48, 0
      %s51 = sadd.s32 %s50, 1
      %s52 = scalar_select %p49, %s50, %s51
      %p55 = pneg %p49
      %p56 = scmp.eq.s32.totalorder %s26, 1
      %p57 = por %p55, %p56
      %p58 = scmp.ne.s32.totalorder %s50, %s53
      %p59 = scmp.eq.s32.totalorder %s26, 0
      %p60 = por %p58, %p59
      %p61 = scmp.ne.s32.totalorder %s50, %s53
      %p62 = scmp.eq.s32.totalorder %s31, 1
      %p63 = por %p61, %p62
      %p64 = scmp.ne.s32.totalorder %s53, %s54
      %p65 = scmp.eq.s32.totalorder %s31, 0
      %p66 = por %p64, %p65
      %p67 = scmp.ne.s32.totalorder %s53, %s54
      %p68 = scmp.eq.s32.totalorder %s32, 1
      %p69 = por %p67, %p68
      %p71 = scmp.ne.s32.totalorder %s54, %s70
      %p72 = scmp.eq.s32.totalorder %s32, 0
      %p73 = por %p71, %p72
      %s74 = ssub.s32 %s33, %s45
      %s75 = ssub.s32 %s34, %s41
      %s76 = sor.u32 %s74, %s75
      %p77 = scmp.eq.s32.totalorder %s76, 0
      %s79 = sadd.s32 %s78, 1
      %s80 = scalar_select %p77, %s78, %s79
      %p83 = pneg %p77
      %p84 = scmp.eq.s32.totalorder %s26, 1
      %p85 = por %p83, %p84
      %p86 = scmp.ne.s32.totalorder %s78, %s81
      %p87 = scmp.eq.s32.totalorder %s26, 0
      %p88 = por %p86, %p87
      %p89 = scmp.ne.s32.totalorder %s78, %s81
      %p90 = scmp.eq.s32.totalorder %s31, 1
      %p91 = por %p89, %p90
      %p92 = scmp.ne.s32.totalorder %s81, %s82
      %p93 = scmp.eq.s32.totalorder %s31, 0
      %p94 = por %p92, %p93
      %p95 = scmp.ne.s32.totalorder %s81, %s82
      %p96 = scmp.eq.s32.totalorder %s32, 1
      %p97 = por %p95, %p96
      %p99 = scmp.ne.s32.totalorder %s82, %s98
      %p100 = scmp.eq.s32.totalorder %s32, 0
      %p101 = por %p99, %p100
      %s102 = ssub.s32 %s33, %s45
      %s103 = ssub.s32 %s34, %s41
      %s104 = sor.u32 %s102, %s103
      %p105 = scmp.eq.s32.totalorder %s104, 0
      %s107 = sadd.s32 %s106, 1
      %s108 = scalar_select %p105, %s106, %s107
      %p111 = pneg %p105
      %p112 = scmp.eq.s32.totalorder %s26, 1
      %p113 = por %p111, %p112
      %p114 = scmp.ne.s32.totalorder %s106, %s109
      %p115 = scmp.eq.s32.totalorder %s26, 0
      %p116 = por %p114, %p115
      %p117 = scmp.ne.s32.totalorder %s106, %s109
      %p118 = scmp.eq.s32.totalorder %s31, 1
      %p119 = por %p117, %p118
      %p120 = scmp.ne.s32.totalorder %s109, %s110
      %p121 = scmp.eq.s32.totalorder %s31, 0
      %p122 = por %p120, %p121
      %p123 = scmp.ne.s32.totalorder %s109, %s110
      %p124 = scmp.eq.s32.totalorder %s32, 1
      %p125 = por %p123, %p124
      %p127 = scmp.ne.s32.totalorder %s110, %s126
      %p128 = scmp.eq.s32.totalorder %s32, 0
      %p129 = por %p127, %p128
      %s131 = sadd.s32 %s130, 1
      %p134 = scmp.eq.s32.totalorder %s26, 1
      %p135 = scmp.ne.s32.totalorder %s130, %s132
      %p136 = scmp.eq.s32.totalorder %s26, 0
      %p137 = por %p135, %p136
      %p138 = scmp.ne.s32.totalorder %s130, %s132
      %p139 = scmp.eq.s32.totalorder %s31, 1
      %p140 = por %p138, %p139
      %p141 = scmp.ne.s32.totalorder %s132, %s133
      %p142 = scmp.eq.s32.totalorder %s31, 0
      %p143 = por %p141, %p142
      %p144 = scmp.ne.s32.totalorder %s132, %s133
      %p145 = scmp.eq.s32.totalorder %s32, 1
      %p146 = por %p144, %p145
      %p148 = scmp.ne.s32.totalorder %s133, %s147
      %p149 = scmp.eq.s32.totalorder %s32, 0
      %p150 = por %p148, %p149
      %s151 = ssub.s32 %s33, %s45
      %p152 = scmp.eq.s32.totalorder %s151, 0
      %s154 = sadd.s32 %s153, 1
      %s155 = scalar_select %p152, %s153, %s154
      %p158 = pneg %p152
      %p159 = scmp.eq.s32.totalorder %s26, 1
      %p160 = por %p158, %p159
      %p161 = scmp.ne.s32.totalorder %s153, %s156
      %p162 = scmp.eq.s32.totalorder %s26, 0
      %p163 = por %p161, %p162
      %p164 = scmp.ne.s32.totalorder %s153, %s156
      %p165 = scmp.eq.s32.totalorder %s31, 1
      %p166 = por %p164, %p165
      %p167 = scmp.ne.s32.totalorder %s156, %s157
      %p168 = scmp.eq.s32.totalorder %s31, 0
      %p169 = por %p167, %p168
      %p170 = scmp.ne.s32.totalorder %s156, %s157
      %p171 = scmp.eq.s32.totalorder %s32, 1
      %p172 = por %p170, %p171
      %p174 = scmp.ne.s32.totalorder %s157, %s173
      %p175 = scmp.eq.s32.totalorder %s32, 0
      %p176 = por %p174, %p175
      %s177 = ssub.s32 %s33, %s45
      %p178 = scmp.eq.s32.totalorder %s177, 0
      %s180 = sadd.s32 %s179, 1
      %s181 = scalar_select %p178, %s179, %s180
      %p184 = pneg %p178
      %p185 = scmp.eq.s32.totalorder %s26, 1
      %p186 = por %p184, %p185
      %p187 = scmp.ne.s32.totalorder %s179, %s182
      %p188 = scmp.eq.s32.totalorder %s26, 0
      %p189 = por %p187, %p188
      %p190 = scmp.ne.s32.totalorder %s179, %s182
      %p191 = scmp.eq.s32.totalorder %s31, 1
      %p192 = por %p190, %p191
      %p193 = scmp.ne.s32.totalorder %s182, %s183
      %p194 = scmp.eq.s32.totalorder %s31, 0
      %p195 = por %p193, %p194
      %p196 = scmp.ne.s32.totalorder %s182, %s183
      %p197 = scmp.eq.s32.totalorder %s32, 1
      %p198 = por %p196, %p197
      %p200 = scmp.ne.s32.totalorder %s183, %s199
      %p201 = scmp.eq.s32.totalorder %s32, 0
      %p202 = por %p200, %p201
      %s203 = ssub.s32 %s33, %s45
      %p204 = scmp.eq.s32.totalorder %s203, 0
      %s206 = sadd.s32 %s205, 1
      %s207 = scalar_select %p204, %s205, %s206
      %p210 = pneg %p204
      %p211 = scmp.eq.s32.totalorder %s26, 1
      %p212 = por %p210, %p211
      %p213 = scmp.ne.s32.totalorder %s205, %s208
      %p214 = scmp.eq.s32.totalorder %s26, 0
      %p215 = por %p213, %p214
      %p216 = scmp.ne.s32.totalorder %s205, %s208
      %p217 = scmp.eq.s32.totalorder %s31, 1
      %p218 = por %p216, %p217
      %p219 = scmp.ne.s32.totalorder %s208, %s209
      %p220 = scmp.eq.s32.totalorder %s31, 0
      %p221 = por %p219, %p220
      %p222 = scmp.ne.s32.totalorder %s208, %s209
      %p223 = scmp.eq.s32.totalorder %s32, 1
      %p224 = por %p222, %p223
      %p226 = scmp.ne.s32.totalorder %s209, %s225
      %p227 = scmp.eq.s32.totalorder %s32, 0
      %p228 = por %p226, %p227
      %p229 = scmp.le.s32.totalorder 1, %s26
      %p230 = scmp.lt.s32.totalorder %s26, 3
      %p231 = pnand %p229, %p230
      %p232 = pneg %p231
      // Predicated region
      $region9: #{tpu_custom_call.1} parent=5 // pred_check
        _
      $region10: #{tpu_custom_call.1} parent=5 // pred_check_branch
        %234 = sbr.rel (%p231) target = $region12
      $region11: #{tpu_custom_call.1} parent=5 // pred_region
        %s235 = ssub.s32 %s26, 1
        // Predicated region
        $region13: #{tpu_custom_call.1} parent=11 // pred_check
          %p236 = pneg %p143
        $region14: #{tpu_custom_call.1} parent=11 // pred_check_branch
          %238 = sbr.rel (%p236) target = $region16
        $region15: #{tpu_custom_call.1} parent=11 // pred_region
          %s240 = ssub.s32 16, 16
          %241 = vsyncadd [#allocation6], %s240
          %s243 = sshll.u32 %s3, 4
          %s244 = int_to_ptr.vmem [resolvable:$true] %s243
          %246 = dma.vmem_to_smem %s244, 16, [#allocation9], [#allocation6]
        $region16: #{tpu_custom_call.1} parent=11 // pred_fallthru
          _
      $region12: #{tpu_custom_call.1} parent=5 // pred_fallthru
        _
      %p247 = scmp.lt.s32.totalorder %s26, 2
      // Predicated region
      $region17: #{tpu_custom_call.1} parent=5 // pred_check
        %p248 = pneg %p247
      $region18: #{tpu_custom_call.1} parent=5 // pred_check_branch
        %250 = sbr.rel (%p248) target = $region20
      $region19: #{tpu_custom_call.1} parent=5 // pred_region
        // Predicated region
        $region21: #{tpu_custom_call.1} parent=19 // pred_check
          %p251 = pneg %p60
        $region22: #{tpu_custom_call.1} parent=19 // pred_check_branch
          %253 = sbr.rel (%p251) target = $region24
        $region23: #{tpu_custom_call.1} parent=19 // pred_region
          %s254 = sand.u32 %s50, 1
          %s255 = scalar_lea.sflag [#allocation4], %s254
          %s256 = sand.u32 %s50, 1
          %s257 = smul.addr %s256, 8
          %s258 = scalar_lea.vmem [#allocation3], %s257
          %s260 = ssub.s32 128, 128
          %261 = vsyncadd %s255, %s260
          %s262 = sadd.s32 %s34, %s33
          %s263 = smul.addr %s262, 128
          %s264 = scalar_lea.hbm %s0, %s263
          %s266 = sshll.u32 %s258, 4
          %s267 = int_to_ptr.vmem [resolvable:$true] %s266
          %269 = dma.hbm_to_vmem [thread:$0]  %s264, 128, %s267, %s255
        $region24: #{tpu_custom_call.1} parent=19 // pred_fallthru
          _
        // Predicated region
        $region25: #{tpu_custom_call.1} parent=19 // pred_check
          %p270 = pneg %p88
        $region26: #{tpu_custom_call.1} parent=19 // pred_check_branch
          %272 = sbr.rel (%p270) target = $region28
        $region27: #{tpu_custom_call.1} parent=19 // pred_region
          %s273 = sand.u32 %s78, 1
          %s274 = scalar_lea.sflag [#allocation8], %s273
          %s275 = sand.u32 %s78, 1
          %s276 = scalar_lea.vmem [#allocation7], %s275
          %s278 = ssub.s32 16, 16
          %279 = vsyncadd %s274, %s278
          %s280 = sadd.s32 %s34, %s33
          %s281 = smul.addr %s280, 16
          %s282 = scalar_lea.hbm %s1, %s281
          %s284 = sshll.u32 %s276, 4
          %s285 = int_to_ptr.vmem [resolvable:$true] %s284
          %287 = dma.hbm_to_vmem [thread:$0]  %s282, 16, %s285, %s274
        $region28: #{tpu_custom_call.1} parent=19 // pred_fallthru
          _
        // Predicated region
        $region29: #{tpu_custom_call.1} parent=19 // pred_check
          %p288 = pneg %p116
        $region30: #{tpu_custom_call.1} parent=19 // pred_check_branch
          %290 = sbr.rel (%p288) target = $region32
        $region31: #{tpu_custom_call.1} parent=19 // pred_region
          %p291 = scmp.lt.s32.totalorder %s33, 1
          %s292 = scalar_select %p291, %s33, 1
          %p293 = scmp.lt.s32.totalorder %s34, 0
          %s294 = scalar_select %p293, %s34, 0
          %s295 = sadd.s32 %s294, %s292
          %s296 = scalar_lea.vmem %s2, %s295
        $region32: #{tpu_custom_call.1} parent=19 // pred_fallthru
          _
      $region20: #{tpu_custom_call.1} parent=5 // pred_fallthru
        _
      %p297 = scmp.le.s32.totalorder 1, %s26
      %p298 = scmp.lt.s32.totalorder %s26, 3
      %p299 = pnand %p297, %p298
      %p300 = pneg %p299
      // Predicated region
      $region33: #{tpu_custom_call.1} parent=5 // pred_check
        _
      $region34: #{tpu_custom_call.1} parent=5 // pred_check_branch
        %302 = sbr.rel (%p299) target = $region36
      $region35: #{tpu_custom_call.1} parent=5 // pred_region
        %s303 = ssub.s32 %s26, 1
        %s304 = sand.u32 %s53, 1
        %s305 = scalar_lea.sflag [#allocation4], %s304
        %s306 = sand.u32 %s53, 1
        %s307 = smul.addr %s306, 8
        %s308 = scalar_lea.vmem [#allocation3], %s307
        // Predicated region
        $region37: #{tpu_custom_call.1} parent=35 // pred_check
          %p309 = pneg %p66
        $region38: #{tpu_custom_call.1} parent=35 // pred_check_branch
          %311 = sbr.rel (%p309) target = $region40
        $region39: #{tpu_custom_call.1} parent=35 // pred_region
          %312 = dma.done %s305, 128
        $region40: #{tpu_custom_call.1} parent=35 // pred_fallthru
          _
        %s313 = sand.u32 %s81, 1
        %s314 = scalar_lea.sflag [#allocation8], %s313
        %s315 = sand.u32 %s81, 1
        %s316 = scalar_lea.vmem [#allocation7], %s315
        // Predicated region
        $region41: #{tpu_custom_call.1} parent=35 // pred_check
          %p317 = pneg %p94
        $region42: #{tpu_custom_call.1} parent=35 // pred_check_branch
          %319 = sbr.rel (%p317) target = $region44
        $region43: #{tpu_custom_call.1} parent=35 // pred_region
          %320 = dma.done %s314, 16
        $region44: #{tpu_custom_call.1} parent=35 // pred_fallthru
          _
        // Predicated region
        $region45: #{tpu_custom_call.1} parent=35 // pred_check
          %p321 = pneg %p143
        $region46: #{tpu_custom_call.1} parent=35 // pred_check_branch
          %323 = sbr.rel (%p321) target = $region48
        $region47: #{tpu_custom_call.1} parent=35 // pred_region
          %324 = dma.done [#allocation6], 16
        $region48: #{tpu_custom_call.1} parent=35 // pred_fallthru
          _
        %325 = sfence
        %s326 = sand.u32 %s53, 1
        %s327 = scalar_lea.sflag [#allocation4], %s326
        %s328 = sand.u32 %s53, 1
        %s329 = smul.addr %s328, 8
        %s330 = scalar_lea.vmem [#allocation3], %s329
        %p331 = pneg %p66
        %p332 = pneg %p63
        %s333 = sand.u32 %s81, 1
        %s334 = scalar_lea.sflag [#allocation8], %s333
        %s335 = sand.u32 %s81, 1
        %s336 = scalar_lea.vmem [#allocation7], %s335
        %p337 = pneg %p94
        %p338 = pneg %p91
        %p339 = scmp.lt.s32.totalorder %s35, 1
        %s340 = scalar_select %p339, %s35, 1
        %p341 = scmp.lt.s32.totalorder %s36, 0
        %s342 = scalar_select %p341, %s36, 0
        %s343 = sadd.s32 %s342, %s340
        %s344 = scalar_lea.vmem %s2, %s343
        %p345 = pneg %p122
        %p346 = pneg %p119
        %p347 = pneg %p143
        %p348 = pneg %p140
        %p349 = pneg %p169
        %p350 = pneg %p166
        %s351 = sand.u32 %s156, 1
        %s352 = scalar_lea.sflag [#allocation5], %s351
        %s353 = sand.u32 %s156, 1
        %s354 = scalar_lea.vmem [#allocation10], %s353
        %p355 = pneg %p195
        %p356 = pneg %p192
        %s357 = sand.u32 %s31, 1
        %s358 = scalar_lea.sflag [#allocation12], %s357
        %s359 = sand.u32 %s182, 1
        %s360 = scalar_lea.vmem [#allocation11], %s359
        %p361 = pneg %p221
        %p362 = pneg %p218
        %s363 = sand.u32 %s31, 1
        %s364 = scalar_lea.sflag [#allocation12], %s363
        %s365 = sand.u32 %s208, 1
        %s366 = scalar_lea.vmem [#allocation13], %s365
        %p367 = scmp.lt.s32.totalorder %s35, 1
        %s368 = scalar_select %p367, %s35, 1
        %p369 = scmp.lt.s32.totalorder %s36, 0
        %s370 = scalar_select %p369, %s36, 0
        %s371 = sadd.s32 %s370, %s368
        %s372 = scalar_lea.vmem %s2, %s371
        %p373 = scmp.eq.s32.totalorder %s36, 0
        // Predicated region
        $region49: #{tpu_custom_call.1} parent=35 // pred_check
          %p374 = pneg %p373
        $region50: #{tpu_custom_call.1} parent=35 // pred_check_branch
          %376 = sbr.rel (%p374) target = $region52
        $region51: #{tpu_custom_call.1} parent=35 // pred_region
          %s377 = scalar_lea.smem [#allocation2], 0
          %378 = sst [smem:[%s377]] 0.0
          %s379 = scalar_lea.smem [#allocation2], 1
          %380 = sst [smem:[%s379]] 0.0
        $region52: #{tpu_custom_call.1} parent=35 // pred_fallthru
          _
        %v381 = vld [vmem:[%s308] sm:$0xff]
        %v382 = vmul.f32 %v381, 0.4945055
        %v383 = vmul.f32 %v381, 0.35714287
        %v385 = vrot.slane %v383, 1
        %v387 = vadd.f32 %v382, %v385
        %v388 = vmul.f32 %v381, -0.6043956
        %v390 = vrot.slane %v388, 2
        %v392 = vadd.f32 %v387, %v390
        %v393 = vmul.f32 %v381, -0.027472528
        %v395 = vrot.slane %v393, 3
        %v397 = vadd.f32 %v392, %v395
        %v398 = vmul.f32 %v381, -0.4945055
        %v400 = vrot.slane %v398, 4
        %v402 = vadd.f32 %v397, %v400
        %v403 = vmul.f32 %v381, -0.35714287
        %v405 = vrot.slane %v403, 5
        %v407 = vadd.f32 %v402, %v405
        %v408 = vmul.f32 %v381, 0.10989011
        %v410 = vrot.slane %v408, 6
        %v412 = vadd.f32 %v407, %v410
        %v413 = vmul.f32 %v381, 0.027472528
        %v415 = vrot.slane %v413, 7
        %v417 = vadd.f32 %v412, %v415
        %v418 = vmul.f32 %v381, %v417
        %v419 = vrot.slane %v413, 1
        %v421 = vadd.f32 %v382, %v419
        %v422 = vrot.slane %v408, 2
        %v424 = vadd.f32 %v421, %v422
        %v425 = vrot.slane %v403, 3
        %v427 = vadd.f32 %v424, %v425
        %v428 = vadd.f32 %v427, %v400
        %v429 = vrot.slane %v393, 5
        %v431 = vadd.f32 %v428, %v429
        %v432 = vrot.slane %v388, 6
        %v434 = vadd.f32 %v431, %v432
        %v435 = vmul.f32 %v381, %v434
        %v437 = vrot.slane %v435, 1
        %v439 = vadd.f32 %v418, %v437
        %v440 = vrot.slane %v403, 1
        %v442 = vadd.f32 %v382, %v440
        %v443 = vadd.f32 %v442, %v422
        %v444 = vadd.f32 %v443, %v395
        %v445 = vadd.f32 %v444, %v400
        %v446 = vrot.slane %v383, 5
        %v448 = vadd.f32 %v445, %v446
        %v449 = vmul.f32 %v381, %v448
        %v451 = vrot.slane %v449, 2
        %v453 = vadd.f32 %v439, %v451
        %v454 = vadd.f32 %v421, %v390
        %v455 = vrot.slane %v383, 3
        %v457 = vadd.f32 %v454, %v455
        %v458 = vadd.f32 %v457, %v400
        %v459 = vmul.f32 %v381, %v458
        %v461 = vrot.slane %v459, 3
        %v463 = vadd.f32 %v453, %v461
        %v464 = vmul.f32 %v381, %v397
        %v466 = vrot.slane %v464, 4
        %v468 = vadd.f32 %v463, %v466
        %v469 = vmul.f32 %v381, %v424
        %v471 = vrot.slane %v469, 5
        %v473 = vadd.f32 %v468, %v471
        %v474 = vmul.f32 %v381, %v442
        %v476 = vrot.slane %v474, 6
        %v478 = vadd.f32 %v473, %v476
        %v479 = vmul.f32 %v381, %v382
        %v481 = vrot.slane %v479, 7
        %v483 = vadd.f32 %v478, %v481
        %v484 = vld [vmem:[%s316] sm:$0x1]
        %v485 = vld [vmem:[%s372] sm:$0x1]
        %v486 = vmul.f32 %v484, %v484
        %v487 = vmul.f32 %v484, %v486
        %v488 = vadd.f32 %v487, 1e-09
        %s489 = sld [smem:[#allocation2]]
        %v490 = vmul.f32 %v488, %v483
        %vm491 = vcmask 1040384
        %v492 = vsel %vm491, %v490, 0.0
        %493 = vadd.xlane.f32.xlu0 %v492
        %v494 = vpop.xlane.xlu0 %493
        %v495 = vrot.slane %v494, 4
        %v496 = vadd.f32 %v494, %v495
        %v497 = vrot.slane %v496, 2
        %v498 = vadd.f32 %v496, %v497
        %v499 = vrot.slane %v498, 1
        %v500 = vadd.f32 %v498, %v499
        %s501 = vtos %v500
        %s502 = sadd.f32 %s489, %s501
        %s503 = scalar_lea.smem [#allocation2], 0
        %504 = sst [smem:[%s503]] %s502
        %s505 = sld [smem:[#allocation2 + $0x1]]
        %v506 = vsub.f32 %v484, %v485
        %v507 = vsel %vm491, %v506, 0.0
        %508 = vadd.xlane.f32.xlu0 %v507
        %v509 = vpop.xlane.xlu0 %508
        %v510 = vrot.slane %v509, 4
        %v511 = vadd.f32 %v509, %v510
        %v512 = vrot.slane %v511, 2
        %v513 = vadd.f32 %v511, %v512
        %v514 = vrot.slane %v513, 1
        %v515 = vadd.f32 %v513, %v514
        %s516 = vtos %v515
        %s517 = sadd.f32 %s505, %s516
        %s518 = scalar_lea.smem [#allocation2], 1
        %519 = sst [smem:[%s518]] %s517
        // Predicated region
        $region53: #{tpu_custom_call.1} parent=35 // pred_check
          %p520 = pneg %p373
        $region54: #{tpu_custom_call.1} parent=35 // pred_check_branch
          %522 = sbr.rel (%p520) target = $region56
        $region55: #{tpu_custom_call.1} parent=35 // pred_region
          %s523 = sld [smem:[#allocation2]]
          %s524 = sld [smem:[#allocation2 + $0x1]]
          %s525 = sand.u32 2147483647, %s524
          %s526 = smul.f32 %s525, 0.0078125
          %s527 = sld [smem:[#allocation9 + %s35]]
          %v528 = vstv %s527
          %v529 = vrcp.pop %v528
          %s530 = vtos %v529
          %s531 = smul.f32 %s523, %s530
          %s532 = smul.f32 %s526, 10.0
          %s533 = sadd.f32 %s531, %s532
          %v534 = vstv %s523
          %535 = vst [vmem:[%s360] sm:$0x1] %v534
          %v536 = vstv %s526
          %537 = vst [vmem:[%s366] sm:$0x1] %v536
          %v538 = vstv %s533
          %539 = vst [vmem:[%s354] sm:$0x1] %v538
        $region56: #{tpu_custom_call.1} parent=35 // pred_fallthru
          _
        %s540 = sand.u32 %s156, 1
        %s541 = scalar_lea.sflag [#allocation5], %s540
        %s542 = sand.u32 %s156, 1
        %s543 = scalar_lea.vmem [#allocation10], %s542
        %s544 = sand.u32 %s31, 1
        %s545 = scalar_lea.sflag [#allocation12], %s544
        %s546 = sand.u32 %s182, 1
        %s547 = scalar_lea.vmem [#allocation11], %s546
        %s548 = sand.u32 %s31, 1
        %s549 = scalar_lea.sflag [#allocation12], %s548
        %s550 = sand.u32 %s208, 1
        %s551 = scalar_lea.vmem [#allocation13], %s550
        // Predicated region
        $region57: #{tpu_custom_call.1} parent=35 // pred_check
          %p552 = pneg %p166
        $region58: #{tpu_custom_call.1} parent=35 // pred_check_branch
          %554 = sbr.rel (%p552) target = $region60
        $region59: #{tpu_custom_call.1} parent=35 // pred_region
          %s556 = ssub.s32 16, 16
          %557 = vsyncadd %s541, %s556
          %s558 = smul.addr %s35, 16
          %s559 = scalar_lea.hbm %s4, %s558
          %s561 = sshll.u32 %s543, 4
          %s562 = int_to_ptr.vmem [resolvable:$true] %s561
          %564 = dma.vmem_to_hbm [thread:$0]  %s562, 16, %s559, %s541
        $region60: #{tpu_custom_call.1} parent=35 // pred_fallthru
          _
        // Predicated region
        $region61: #{tpu_custom_call.1} parent=35 // pred_check
          %p565 = pneg %p192
        $region62: #{tpu_custom_call.1} parent=35 // pred_check_branch
          %567 = sbr.rel (%p565) target = $region64
        $region63: #{tpu_custom_call.1} parent=35 // pred_region
          %s569 = ssub.s32 16, 16
          %570 = vsyncadd %s545, %s569
          %s571 = smul.addr %s35, 16
          %s572 = scalar_lea.hbm %s5, %s571
          %s574 = sshll.u32 %s547, 4
          %s575 = int_to_ptr.vmem [resolvable:$true] %s574
          %577 = dma.vmem_to_hbm [thread:$0]  %s575, 16, %s572, %s545
        $region64: #{tpu_custom_call.1} parent=35 // pred_fallthru
          _
        // Predicated region
        $region65: #{tpu_custom_call.1} parent=35 // pred_check
          %p578 = pneg %p218
        $region66: #{tpu_custom_call.1} parent=35 // pred_check_branch
          %580 = sbr.rel (%p578) target = $region68
        $region67: #{tpu_custom_call.1} parent=35 // pred_region
          %s582 = ssub.s32 16, 16
          %583 = vsyncadd %s549, %s582
          %s584 = smul.addr %s35, 16
          %s585 = scalar_lea.hbm %s6, %s584
          %s587 = sshll.u32 %s551, 4
          %s588 = int_to_ptr.vmem [resolvable:$true] %s587
          %590 = dma.vmem_to_hbm [thread:$0]  %s588, 16, %s585, %s549
        $region68: #{tpu_custom_call.1} parent=35 // pred_fallthru
          _
      $region36: #{tpu_custom_call.1} parent=5 // pred_fallthru
        _
      %p591 = scmp.le.s32.totalorder 2, %s26
      // Predicated region
      $region69: #{tpu_custom_call.1} parent=5 // pred_check
        %p592 = pneg %p591
      $region70: #{tpu_custom_call.1} parent=5 // pred_check_branch
        %594 = sbr.rel (%p592) target = $region72
      $region71: #{tpu_custom_call.1} parent=5 // pred_region
        %s595 = ssub.s32 %s26, 2
        // Predicated region
        $region73: #{tpu_custom_call.1} parent=71 // pred_check
          %p596 = pneg %p172
        $region74: #{tpu_custom_call.1} parent=71 // pred_check_branch
          %598 = sbr.rel (%p596) target = $region76
        $region75: #{tpu_custom_call.1} parent=71 // pred_region
          %s599 = sand.u32 %s157, 1
          %s600 = scalar_lea.sflag [#allocation5], %s599
          %s601 = sand.u32 %s157, 1
          %s602 = scalar_lea.vmem [#allocation10], %s601
          %603 = dma.done %s600, 16
        $region76: #{tpu_custom_call.1} parent=71 // pred_fallthru
          _
        // Predicated region
        $region77: #{tpu_custom_call.1} parent=71 // pred_check
          %p604 = pneg %p198
        $region78: #{tpu_custom_call.1} parent=71 // pred_check_branch
          %606 = sbr.rel (%p604) target = $region80
        $region79: #{tpu_custom_call.1} parent=71 // pred_region
          %s607 = sand.u32 %s32, 1
          %s608 = scalar_lea.sflag [#allocation12], %s607
          %s609 = sand.u32 %s183, 1
          %s610 = scalar_lea.vmem [#allocation11], %s609
          %611 = dma.done %s608, 16
        $region80: #{tpu_custom_call.1} parent=71 // pred_fallthru
          _
        // Predicated region
        $region81: #{tpu_custom_call.1} parent=71 // pred_check
          %p612 = pneg %p224
        $region82: #{tpu_custom_call.1} parent=71 // pred_check_branch
          %614 = sbr.rel (%p612) target = $region84
        $region83: #{tpu_custom_call.1} parent=71 // pred_region
          %s615 = sand.u32 %s32, 1
          %s616 = scalar_lea.sflag [#allocation12], %s615
          %s617 = sand.u32 %s209, 1
          %s618 = scalar_lea.vmem [#allocation13], %s617
          %619 = dma.done %s616, 16
        $region84: #{tpu_custom_call.1} parent=71 // pred_fallthru
          _
      $region72: #{tpu_custom_call.1} parent=5 // pred_fallthru
        _
    $region6: #{tpu_custom_call.1} parent=1 // loop_footer
      %s30 = sadd.s32 1, %s26
    $region7: #{tpu_custom_call.1} parent=1 // loop_footer_branch
      %25 = sbr.rel target = $region3
    $region8: #{tpu_custom_call.1} parent=1 // loop_exit
      _
    %620 = vsyncpa [#allocation4], 1
    %s621 = scalar_lea.sflag [#allocation4], 1
    %622 = vsyncpa %s621, 1
    %623 = vsyncpa [#allocation8], 1
    %s624 = scalar_lea.sflag [#allocation8], 1
    %625 = vsyncpa %s624, 1
    %626 = vsyncpa [#allocation5], 1
    %s627 = scalar_lea.sflag [#allocation5], 1
    %628 = vsyncpa %s627, 1
    %629 = vsyncpa [#allocation12], 1
    %s630 = scalar_lea.sflag [#allocation12], 1
    %631 = vsyncpa %s630, 1
    %632 = vsyncpa [#allocation6], 1
    %s633 = scalar_lea.sflag [#allocation6], 1
    %634 = vsyncpa %s633, 1

</llo_original>
